<compile_context>
chip_gen: v7x
topology: tpu7x:2x2x1
jax: 0.10.0
libtpu: 0.0.40
codegen_flags: <defaults>
</compile_context>

<pallas_src>
import functools
import os

import jax
import jax.numpy as jnp
from jax import lax
from jax.experimental import pallas as pl
from jax.experimental.pallas import tpu as pltpu


_SUB = 256        # MXU-native sub-block rows for the in-tile prefix sum
_MAX_TILE_S = 2048  # sample rows per grid step (DMA amortization)


def _round_up(x: int, m: int) -> int:
    return ((x + m - 1) // m) * m


def _route_decision_kernel(score_ref, hot_ref, idx_ref, loads_ref,
                           carry_ref, tri_ref, *,
                           num_samples: int, tile_s: int, sub: int,
                           num_experts: int):
    s_id = pl.program_id(0)  # sample-tile index ("arbitrary" / sequential)

    # Init the per-expert running count and the loop-invariant lower-tri
    # sub-block ONCE for the whole grid.
    @pl.when(s_id == 0)
    def _init():
        carry_ref[...] = jnp.zeros_like(carry_ref)
        ri = lax.broadcasted_iota(jnp.int32, (sub, sub), 0)
        rj = lax.broadcasted_iota(jnp.int32, (sub, sub), 1)
        tri_ref[...] = (ri >= rj).astype(tri_ref.dtype)

    tri = tri_ref[...]
    n_sub = tile_s // sub  # static

    def body(i, carry):
        off = pl.multiple_of(i * sub, sub)
        x = score_ref[pl.ds(off, sub), :].astype(jnp.float32)      # [sub, E]

        # --- top-1 one-hot (first argmax wins, matches torch.argmax) -------
        row_max = jnp.max(x, axis=-1, keepdims=True)                # XLU
        col = lax.broadcasted_iota(jnp.int32, x.shape, 1)
        first_max = jnp.min(jnp.where(x == row_max, col, num_experts),
                            axis=-1, keepdims=True)                 # XLU
        hot = (col == first_max).astype(jnp.float32)                # 0/1 f32

        # Mask rows past the real sample count (clipped tail tile -> garbage).
        row = lax.broadcasted_iota(jnp.int32, x.shape, 0) + s_id * tile_s + off
        hot = jnp.where(row < num_samples, hot, 0.0)

        # --- inclusive prefix sum over samples via lower-tri matmul (MXU) ---
        cum = jnp.dot(tri, hot.astype(tri.dtype),
                      preferred_element_type=jnp.float32)           # [sub, E]
        idx = (cum + carry) * hot                                   # 1-based

        hot_ref[pl.ds(off, sub), :] = hot.astype(jnp.int32).astype(hot_ref.dtype)
        idx_ref[pl.ds(off, sub), :] = idx.astype(idx_ref.dtype)

        return carry + cum[sub - 1:sub, :]                          # [1, E]

    carry = lax.fori_loop(0, n_sub, body, carry_ref[...], unroll=True)
    carry_ref[...] = carry

    # loads come for free from the carried running count at the last tile.
    @pl.when(s_id == pl.num_programs(0) - 1)
    def _finalize():
        loads_ref[...] = carry.astype(loads_ref.dtype)


class ProtocolBase:
    """JAX/Pallas port of brt ProtocolBase with a concrete top-1 dst_index decision."""

    def __init__(self, debug=None, **kwargs):
        if debug is None:
            debug = os.environ.get("BRT_DEBUG", "False").lower() in ["true", "1"]
        self.debug = debug

    def __call__(self, score, *args, **kwargs):
        decisions = self.make_route_decision(score, *args, **kwargs)
        if self.debug:
            self.check_decision(decisions, score)
        return decisions

    def make_route_decision(self, score, **kwargs):
        S, E = score.shape
        assert E <= 128, "top-1 decision kernel supports at most 128 experts"

        # ---- tiling (no padding of either axis) ------------------------------
        if S <= _SUB:
            sub = S                       # single sub-block covering all rows
            ts = S                        # block == full array dims (always legal)
        else:
            sub = _SUB                    # fixed MXU-native sub-block
            ts = min(_MAX_TILE_S, (S // sub) * sub)   # multiple of sub (>= 256)
        grid_s = pl.cdiv(S, ts)
        mm_dtype = jnp.bfloat16 if sub >= 128 else jnp.float32

        # ---- VMEM budget (lane-padded tiled footprint + headroom) ------------
        lane_e = _round_up(E, 128)
        blk = ts * lane_e
        vmem_limit = int(2 * (4 * blk          # score f32 (double-buffered)
                              + 4 * blk        # route_index int32
                              + 1 * blk)       # hot_mask int8
                         + 2 * 8 * lane_e * 4  # loads block
                         + 8 * lane_e * 4      # carry scratch
                         + sub * sub * jnp.dtype(mm_dtype).itemsize
                         + (12 << 20))         # headroom for in-kernel temporaries

        kernel = functools.partial(_route_decision_kernel, num_samples=S,
                                   tile_s=ts, sub=sub, num_experts=E)

        hot_mask, route_index, loads = pl.pallas_call(
            kernel,
            out_shape=(
                jax.ShapeDtypeStruct((S, E), jnp.int8),    # hot_mask (0/1)
                jax.ShapeDtypeStruct((S, E), jnp.int32),   # dst_index
                jax.ShapeDtypeStruct((1, E), jnp.int32),   # loads
            ),
            grid_spec=pltpu.PrefetchScalarGridSpec(
                num_scalar_prefetch=0,
                grid=(grid_s,),
                in_specs=[pl.BlockSpec((ts, E), lambda s: (s, 0))],
                out_specs=(
                    pl.BlockSpec((ts, E), lambda s: (s, 0)),
                    pl.BlockSpec((ts, E), lambda s: (s, 0)),
                    pl.BlockSpec((1, E), lambda s: (0, 0)),
                ),
                scratch_shapes=[
                    pltpu.VMEM((1, E), jnp.float32),     # per-expert running count
                    pltpu.VMEM((sub, sub), mm_dtype),    # fixed lower-tri sub-block
                ],
            ),
            compiler_params=pltpu.CompilerParams(
                dimension_semantics=("arbitrary",),
                vmem_limit_bytes=vmem_limit,
            ),
        )(score)

        return hot_mask, route_index, loads[0]

    def check_decision(self, decisions, scores) -> bool:
        hot_mask = decisions[0]
        assert hot_mask.shape[0] == scores.shape[0], (
            "indices and scores should have the same size in the first dimension"
        )
        return True

    def check_compatibility(self, kwargs) -> None:
        pass


def _reference(score):
    S, E = score.shape
    hot = jax.nn.one_hot(jnp.argmax(score, axis=-1), E, dtype=jnp.int32)
    idx = (jnp.cumsum(hot, axis=0) * hot).astype(jnp.int32)
    loads = jnp.sum(hot, axis=0).astype(jnp.int32)
    return hot, idx, loads


if __name__ == "__main__":
    proto = ProtocolBase(debug=True)
    key = jax.random.PRNGKey(0)

    # (S=8, E=4): single full block.  (S=640, E=4): multi-tile path with a
    # carried count across grid steps, multi-sub-block scan and a masked tail.
    for (S, E) in [(8, 4), (640, 4)]:
        key, sk = jax.random.split(key)
        score = jax.random.normal(sk, (S, E), dtype=jnp.float32)

        hot_mask, route_index, loads = proto(score)
        jax.block_until_ready((hot_mask, route_index, loads))

        ref_hot, ref_idx, ref_loads = _reference(score)
        assert hot_mask.shape == (S, E)
        assert route_index.shape == (S, E)
        assert loads.shape == (E,)
        assert bool(jnp.all(hot_mask.astype(jnp.int32) == ref_hot))
        assert bool(jnp.all(route_index == ref_idx))
        assert bool(jnp.all(loads == ref_loads))
        assert int(jnp.sum(hot_mask.astype(jnp.int32))) == S
        assert int(jnp.sum(loads)) == S

    print("KERNEL_OK")
</pallas_src>

<mosaic_0001>
module attributes {stable_mosaic.version = 11 : i64} {
  func.func @_route_decision_kernel(%arg0: i32, %arg1: memref<8x4xf32, #tpu.memory_space<vmem>>, %arg2: memref<8x4xi8, #tpu.memory_space<vmem>>, %arg3: memref<8x4xi32, #tpu.memory_space<vmem>>, %arg4: memref<1x4xi32, #tpu.memory_space<vmem>>, %arg5: memref<1x4xf32, #tpu.memory_space<vmem>>, %arg6: memref<8x8xf32, #tpu.memory_space<vmem>>) attributes {dimension_semantics = [#tpu.dimension_semantics<arbitrary>], iteration_bounds = array<i64: 1>, scalar_prefetch = 0 : i64, scratch_operands = 2 : i64, tpu.core_type = #tpu.core_type<tc>, window_params = [{transform_indices = @transform_0, window_bounds = array<i64: 8, 4>}, {transform_indices = @transform_1, window_bounds = array<i64: 8, 4>}, {transform_indices = @transform_2, window_bounds = array<i64: 8, 4>}, {pipeline_mode = #tpu.pipeline_mode<synchronous>, transform_indices = @transform_3, window_bounds = array<i64: 1, 4>}]} {
    %c0_i32 = arith.constant 0 : i32
    %0 = arith.cmpi eq, %arg0, %c0_i32 : i32
    %1 = arith.extui %0 : i1 to i32
    %c0_i32_0 = arith.constant 0 : i32
    %2 = arith.cmpi ne, %1, %c0_i32_0 : i32
    scf.if %2 {
      %cst_17 = arith.constant 0.000000e+00 : f32
      %49 = vector.broadcast %cst_17 : f32 to vector<1x4xf32>
      %c0_18 = arith.constant 0 : index
      %c0_19 = arith.constant 0 : index
      %50 = vector.load %arg5[%c0_18, %c0_19] : memref<1x4xf32, #tpu.memory_space<vmem>>, vector<1x4xf32>
      tpu.vector_store %arg5[%c0_18, %c0_19], %49 {strides = array<i32>} : memref<1x4xf32, #tpu.memory_space<vmem>>, vector<1x4xf32>,
      %51 = tpu.iota {dimensions = array<i32: 0>} : vector<8x8xi32>
      %52 = tpu.iota {dimensions = array<i32: 1>} : vector<8x8xi32>
      %53 = arith.cmpi sge, %51, %52 : vector<8x8xi32>
      %54 = arith.extui %53 : vector<8x8xi1> to vector<8x8xi32>
      %55 = arith.sitofp %54 : vector<8x8xi32> to vector<8x8xf32>
      %c0_20 = arith.constant 0 : index
      %c0_21 = arith.constant 0 : index
      %56 = vector.load %arg6[%c0_20, %c0_21] : memref<8x8xf32, #tpu.memory_space<vmem>>, vector<8x8xf32>
      tpu.vector_store %arg6[%c0_20, %c0_21], %55 {strides = array<i32>} : memref<8x8xf32, #tpu.memory_space<vmem>>, vector<8x8xf32>,
    } else {
    }
    %c0 = arith.constant 0 : index
    %c0_1 = arith.constant 0 : index
    %3 = vector.load %arg6[%c0, %c0_1] : memref<8x8xf32, #tpu.memory_space<vmem>>, vector<8x8xf32>
    %c0_2 = arith.constant 0 : index
    %c0_3 = arith.constant 0 : index
    %4 = vector.load %arg5[%c0_2, %c0_3] : memref<1x4xf32, #tpu.memory_space<vmem>>, vector<1x4xf32>
    %c0_i32_4 = arith.constant 0 : i32
    %c8_i32 = arith.constant 8 : i32
    %5 = arith.muli %c0_i32_4, %c8_i32 : i32
    %6 = tpu.assume_multiple %5, 8 : i32
    %7 = arith.index_cast %6 : i32 to index
    %c0_5 = arith.constant 0 : index
    %8 = vector.load %arg1[%7, %c0_5] : memref<8x4xf32, #tpu.memory_space<vmem>>, vector<8x4xf32>
    %cst = arith.constant dense<0xFF800000> : vector<8xf32>
    %9 = vector.multi_reduction <maximumf>, %8, %cst [1] : vector<8x4xf32> to vector<8xf32>
    %10 = vector.shape_cast %9 : vector<8xf32> to vector<8x1xf32>
    %11 = tpu.iota {dimensions = array<i32: 1>} : vector<8x4xi32>
    %12 = vector.broadcast %10 : vector<8x1xf32> to vector<8x4xf32>
    %13 = arith.cmpf oeq, %8, %12 : vector<8x4xf32>
    %c4_i32 = arith.constant 4 : i32
    %14 = vector.broadcast %c4_i32 : i32 to vector<8x4xi32>
    %15 = arith.select %13, %11, %14 : vector<8x4xi1>, vector<8x4xi32>
    %cst_6 = arith.constant dense<2147483647> : vector<8xi32>
    %16 = vector.multi_reduction <minsi>, %15, %cst_6 [1] : vector<8x4xi32> to vector<8xi32>
    %17 = vector.shape_cast %16 : vector<8xi32> to vector<8x1xi32>
    %18 = vector.broadcast %17 : vector<8x1xi32> to vector<8x4xi32>
    %19 = arith.cmpi eq, %11, %18 : vector<8x4xi32>
    %20 = arith.extui %19 : vector<8x4xi1> to vector<8x4xi32>
    %21 = arith.sitofp %20 : vector<8x4xi32> to vector<8x4xf32>
    %22 = tpu.iota {dimensions = array<i32: 0>} : vector<8x4xi32>
    %c8_i32_7 = arith.constant 8 : i32
    %23 = arith.muli %arg0, %c8_i32_7 : i32
    %24 = vector.broadcast %23 : i32 to vector<8x4xi32>
    %25 = arith.addi %22, %24 : vector<8x4xi32>
    %26 = vector.broadcast %6 : i32 to vector<8x4xi32>
    %27 = arith.addi %25, %26 : vector<8x4xi32>
    %c8_i32_8 = arith.constant 8 : i32
    %28 = vector.broadcast %c8_i32_8 : i32 to vector<8x4xi32>
    %29 = arith.cmpi slt, %27, %28 : vector<8x4xi32>
    %cst_9 = arith.constant 0.000000e+00 : f32
    %30 = vector.broadcast %cst_9 : f32 to vector<8x4xf32>
    %31 = arith.select %29, %21, %30 : vector<8x4xi1>, vector<8x4xf32>
    %cst_10 = arith.constant dense<0.000000e+00> : vector<8x4xf32>
    %32 = tpu.matmul %3, %31, %cst_10 {dimension_numbers = #tpu.dot_dimension_numbers<[1], [0], [0], [1], [0, 0, 1, 1], [], []>} : vector<8x8xf32>, vector<8x4xf32>, vector<8x4xf32> -> vector<8x4xf32>
    %33 = vector.broadcast %4 : vector<1x4xf32> to vector<8x4xf32>
    %34 = arith.addf %32, %33 : vector<8x4xf32>
    %35 = arith.mulf %34, %31 : vector<8x4xf32>
    %36 = arith.fptosi %31 : vector<8x4xf32> to vector<8x4xi32>
    %37 = arith.trunci %36 : vector<8x4xi32> to vector<8x4xi8>
    %38 = arith.index_cast %6 : i32 to index
    %c0_11 = arith.constant 0 : index
    %39 = vector.load %arg2[%38, %c0_11] : memref<8x4xi8, #tpu.memory_space<vmem>>, vector<8x4xi8>
    tpu.vector_store %arg2[%38, %c0_11], %37 {strides = array<i32>} : memref<8x4xi8, #tpu.memory_space<vmem>>, vector<8x4xi8>,
    %40 = arith.fptosi %35 : vector<8x4xf32> to vector<8x4xi32>
    %41 = arith.index_cast %6 : i32 to index
    %c0_12 = arith.constant 0 : index
    %42 = vector.load %arg3[%41, %c0_12] : memref<8x4xi32, #tpu.memory_space<vmem>>, vector<8x4xi32>
    tpu.vector_store %arg3[%41, %c0_12], %40 {strides = array<i32>} : memref<8x4xi32, #tpu.memory_space<vmem>>, vector<8x4xi32>,
    %43 = vector.extract_strided_slice %32 {offsets = [7, 0], sizes = [1, 4], strides = [1, 1]} : vector<8x4xf32> to vector<1x4xf32>
    %44 = arith.addf %4, %43 : vector<1x4xf32>
    %c1_i32 = arith.constant 1 : i32
    %c0_13 = arith.constant 0 : index
    %c0_14 = arith.constant 0 : index
    %45 = vector.load %arg5[%c0_13, %c0_14] : memref<1x4xf32, #tpu.memory_space<vmem>>, vector<1x4xf32>
    tpu.vector_store %arg5[%c0_13, %c0_14], %44 {strides = array<i32>} : memref<1x4xf32, #tpu.memory_space<vmem>>, vector<1x4xf32>,
    %c0_i32_15 = arith.constant 0 : i32
    %46 = arith.cmpi eq, %arg0, %c0_i32_15 : i32
    %47 = arith.extui %46 : i1 to i32
    %c0_i32_16 = arith.constant 0 : i32
    %48 = arith.cmpi ne, %47, %c0_i32_16 : i32
    scf.if %48 {
      %49 = arith.fptosi %44 : vector<1x4xf32> to vector<1x4xi32>
      %c0_17 = arith.constant 0 : index
      %c0_18 = arith.constant 0 : index
      %50 = vector.load %arg4[%c0_17, %c0_18] : memref<1x4xi32, #tpu.memory_space<vmem>>, vector<1x4xi32>
      tpu.vector_store %arg4[%c0_17, %c0_18], %49 {strides = array<i32>} : memref<1x4xi32, #tpu.memory_space<vmem>>, vector<1x4xi32>,
    } else {
    }
    return
  }
  func.func @transform_0(%arg0: i32) -> (i32, i32) {
    %c0_i32 = arith.constant 0 : i32
    %c0_i32_0 = arith.constant 0 : i32
    return %arg0, %c0_i32 : i32, i32
  }
  func.func @transform_1(%arg0: i32) -> (i32, i32) {
    %c0_i32 = arith.constant 0 : i32
    %c0_i32_0 = arith.constant 0 : i32
    return %arg0, %c0_i32 : i32, i32
  }
  func.func @transform_2(%arg0: i32) -> (i32, i32) {
    %c0_i32 = arith.constant 0 : i32
    %c0_i32_0 = arith.constant 0 : i32
    return %arg0, %c0_i32 : i32, i32
  }
  func.func @transform_3(%arg0: i32) -> (i32, i32) {
    %c0_i32 = arith.constant 0 : i32
    %c0_i32_0 = arith.constant 0 : i32
    %c0_i32_1 = arith.constant 0 : i32
    return %c0_i32, %c0_i32_0 : i32, i32
  }
}

</mosaic_0001>

<llo_original>
// kernel: tpu_custom_call.1
$region0: #{tpu_custom_call.1}
  #allocation0 [shape = 'u32[]', space=smem, size = 0x4, offset = 0x4, fixed_abs, tag = 'smem constant byte address 0x4 - core index']
  #allocation1 [shape = 'u32[144,128]{1,0:T(1,128)}', space=vmem, size = 0x12000, scoped, tag = 'internal scratch']
  #allocation2 [shape = 'f32[1,4]{1,0:T(1,128)}', space=vmem, size = 0x200, scoped, tag = 'scratch operand']
  #allocation3 [shape = 'f32[8,8]{1,0:T(8,128)}', space=vmem, size = 0x1000, scoped, tag = 'scratch operand']
  %s0 = inlined_call_operand.vmem [shape: f32[8,4], index: 0, kind: input, shape index: {}]
  %s1 = inlined_call_operand.vmem [shape: s8[8,4], index: 1, kind: output, shape index: {0}]
  %s2 = inlined_call_operand.vmem [shape: s32[8,4], index: 2, kind: output, shape index: {1}]
  %s3 = inlined_call_operand.hbm [shape: s32[1,4], index: 3, kind: output, shape index: {2}]
  %4 = xla_tuple %s1, %s2, %s3
  %s5 = sld [smem:[#allocation0]]
  $region38: #{tpu_custom_call.1} parent=0
    _
  %s7 = ssub.s32 1, %s5
  %s8 = scalar_select 0, %s7, %s5
  $region1: #{tpu_custom_call.1} parent=0
    #allocation4 [shape = 'u8[512]{0}', space=vmem, size = 0x400, scoped, tag = 'output window, operand 2, single buffered']
    #allocation5 [shape = 's32[1]{0}', space=sflag, size = 0x4, scoped, tag = 'scoped memory for tpu_custom_call.1']
    %9 = vsyncpa [#allocation5], 0
    // Predicated region
    $region2: #{tpu_custom_call.1} parent=1 // pred_check
      _
    $region3: #{tpu_custom_call.1} parent=1 // pred_check_branch
      %11 = sbr.rel (0) target = $region5
    $region4: #{tpu_custom_call.1} parent=1 // pred_region
      _
    $region5: #{tpu_custom_call.1} parent=1 // pred_fallthru
      _
    %p12 = scmp.eq.s32.totalorder 0, 0
    // Predicated region
    $region6: #{tpu_custom_call.1} parent=1 // pred_check
      %p13 = pneg %p12
    $region7: #{tpu_custom_call.1} parent=1 // pred_check_branch
      %15 = sbr.rel (%p13) target = $region9
    $region8: #{tpu_custom_call.1} parent=1 // pred_region
      %vm16 = vcmask 24576
      %17 = vst.msk [vmem:[#allocation2] sm:$0x1] %vm16, 0.0
      %v18 = vlaneseq
      %v19 = vshrl.u32 %v18, 7
      %v20 = vlaneseq
      %v21 = vand.u32 %v20, 127
      %vm22 = vcmp.ge.s32.totalorder %v19, %v21
      %v23 = vsel %vm22, 1, 0
      %v24 = vcvt.s32.f32 %v23
      %vm25 = vcmask 64512
      %26 = vst.msk [vmem:[#allocation3] sm:$0xff] %vm25, %v24
    $region9: #{tpu_custom_call.1} parent=1 // pred_fallthru
      _
    %v27 = vld [vmem:[#allocation3] sm:$0xff]
    %v28 = vld [vmem:[#allocation2] sm:$0x1]
    %v29 = vld [vmem:[%s0] sm:$0xff]
    %vm30 = vcmask 31744
    %v31 = vsel %vm30, %v29, -inf
    %32 = vmax.xlane.f32.xlu0 %v31
    %v33 = vpop.xlane.xlu0 %32
    %v34 = vlaneseq
    %v35 = vand.u32 %v34, 127
    %vm36 = vcmp.eq.f32.partialorder %v29, %v33
    %v37 = vsel %vm36, %v35, 4
    %v38 = vsel %vm30, %v37, 2147483647
    %v39 = vand.u32 %v38, 65535
    %v40 = vshra.s32 %v38, 16
    %v41 = vcvt.s32.f32 %v39
    %v42 = vcvt.s32.f32 %v40
    %43 = vmin.xlane.f32.xlu0 %v42
    %v44 = vpop.xlane.xlu0 %43
    %vm45 = vcmp.eq.f32.partialorder %v42, %v44
    %v46 = vsel %vm45, %v41, inf
    %47 = vmin.xlane.f32.xlu0 %v46
    %v48 = vpop.xlane.xlu0 %47
    %v49 = vcvt.f32.s32 %v48
    %v50 = vcvt.f32.s32 %v44
    %v51 = vshll.u32 %v50, 16
    %v52 = vadd.s32 %v51, %v49
    %vm53 = vcmp.eq.s32.totalorder %v35, %v52
    %v54 = vsel %vm53, 1, 0
    %v55 = vcvt.s32.f32 %v54
    %v56 = vlaneseq
    %v57 = vshrl.u32 %v56, 7
    %s58 = smul.u32 0, 8
    %v59 = vstv %s58
    %v60 = vadd.s32 %v57, %v59
    %v61 = vstv 0
    %v62 = vadd.s32 %v60, %v61
    %vm63 = vcmp.lt.s32.totalorder %v62, 8
    %v64 = vsel %vm63, %v55, 0.0
    %vm65 = vcmask 64512
    %v67 = vsel %vm65, %v27, 0
    %69 = vmatprep.subr.mxu0 0.0
    %70 = vmatpush1.msra.mxu0 %v64
    %71 = vmatprep.subr.mxu0 0.0
    %72 = vmatpush1.msra.mxu0 0.0
    %73 = vmatprep.subr.mxu0 0.0
    %74 = vmatpush1.msra.mxu0 0.0
    %75 = vmatprep.subr.mxu0 0.0
    %76 = vmatpush1.msra.mxu0 0.0
    %77 = vmatprep.subr.mxu0 0.0
    %78 = vmatpush1.msra.mxu0 0.0
    %79 = vmatprep.subr.mxu0 0.0
    %80 = vmatpush1.msra.mxu0 0.0
    %81 = vmatprep.subr.mxu0 0.0
    %82 = vmatpush1.msra.mxu0 0.0
    %83 = vmatprep.subr.mxu0 0.0
    %84 = vmatpush1.msra.mxu0 0.0
    %85 = vmatprep.subr.mxu0 0.0
    %86 = vmatpush1.msra.mxu0 0.0
    %87 = vmatprep.subr.mxu0 0.0
    %88 = vmatpush1.msra.mxu0 0.0
    %89 = vmatprep.subr.mxu0 0.0
    %90 = vmatpush1.msra.mxu0 0.0
    %91 = vmatprep.subr.mxu0 0.0
    %92 = vmatpush1.msra.mxu0 0.0
    %93 = vmatprep.subr.mxu0 0.0
    %94 = vmatpush1.msra.mxu0 0.0
    %95 = vmatprep.subr.mxu0 0.0
    %96 = vmatpush1.msra.mxu0 0.0
    %97 = vmatprep.subr.mxu0 0.0
    %98 = vmatpush1.msra.mxu0 0.0
    %99 = vmatprep.subr.mxu0 0.0
    %100 = vmatpush1.msra.mxu0 0.0
    %101 = vmatprep.subr.mxu0 0.0
    %102 = vmatpush1.msra.mxu0 0.0
    %103 = vmatprep.subr.mxu0 0.0
    %104 = vmatpush1.msra.mxu0 0.0
    %105 = vmatprep.subr.mxu0 0.0
    %106 = vmatpush1.msra.mxu0 0.0
    %107 = vmatprep.subr.mxu0 0.0
    %108 = vmatpush1.msra.mxu0 0.0
    %109 = vmatprep.subr.mxu0 0.0
    %110 = vmatpush1.msra.mxu0 0.0
    %111 = vmatprep.subr.mxu0 0.0
    %112 = vmatpush1.msra.mxu0 0.0
    %113 = vmatprep.subr.mxu0 0.0
    %114 = vmatpush1.msra.mxu0 0.0
    %115 = vmatprep.subr.mxu0 0.0
    %116 = vmatpush1.msra.mxu0 0.0
    %117 = vmatprep.subr.mxu0 0.0
    %118 = vmatpush1.msra.mxu0 0.0
    %119 = vmatprep.subr.mxu0 0.0
    %120 = vmatpush1.msra.mxu0 0.0
    %121 = vmatprep.subr.mxu0 0.0
    %122 = vmatpush1.msra.mxu0 0.0
    %123 = vmatprep.subr.mxu0 0.0
    %124 = vmatpush1.msra.mxu0 0.0
    %125 = vmatprep.subr.mxu0 0.0
    %126 = vmatpush1.msra.mxu0 0.0
    %127 = vmatprep.subr.mxu0 0.0
    %128 = vmatpush1.msra.mxu0 0.0
    %129 = vmatprep.subr.mxu0 0.0
    %130 = vmatpush1.msra.mxu0 0.0
    %131 = vmatprep.subr.mxu0 0.0
    %132 = vmatpush1.msra.mxu0 0.0
    %133 = vmatprep.mubr.f32.mxu0 0.0
    %134 = vmatmul.mubr.f32.gmra.mrb[0].mxu0 %v67
    %v135 = vpop.f32.mrb[0].mxu0
    %v136 = vadd.f32 0.0, %v135
    %v137 = vpop.f32.mrb[0].mxu0
    %138 = vdwg.mxu0
    %v140 = vlaneseq
    %v141 = vshrl.u32 %v140, 7
    %v142 = vsub.s32 0, %v141
    %v143 = vrot.slane %v28, %v142
    %v145 = vadd.f32 %v136, %v143
    %v146 = vmul.f32 %v145, %v64
    %v147 = vcvt.f32.s32.to.zero.pseudo %v64
    %v148 = vpack.c.b16 %v147, %v147
    %v149 = vpack.c.b8 %v148, %v148
    %vm150 = vcmask 25600
    %151 = vst.msk [vmem:[%s1] sm:$0x3] %vm150, %v149
    %v152 = vcvt.f32.s32.to.zero.pseudo %v146
    %153 = vst.msk [vmem:[%s2] sm:$0xff] %vm30, %v152
    %v155 = vcombine.high %v136, %v136
    %v157 = vunpack.c.l.s4 1966171168
    %v158 = vunpack.c.0.s8 %v157
    %v159 = vlaneseq
    %v160 = vshrl.u32 %v159, 7
    %v161 = vsub.s32 %v158, %v160
    %v162 = vrot.slane %v155, %v161
    %v163 = vcombine.high %v162, %v162
    %v165 = vunpack.c.l.s4 1966171168
    %v166 = vunpack.c.0.s8 %v165
    %v167 = vlaneseq
    %v168 = vshrl.u32 %v167, 7
    %v169 = vsub.s32 %v166, %v168
    %v170 = vrot.slane %v163, %v169
    %v171 = vcombine.high %v170, %v170
    %v173 = vadd.f32 %v28, %v171
    %vm174 = vcmask 24576
    %175 = vst.msk [vmem:[#allocation2] sm:$0x1] %vm174, %v173
    // Predicated region
    $region10: #{tpu_custom_call.1} parent=1 // pred_check
      %p176 = pneg %p12
    $region11: #{tpu_custom_call.1} parent=1 // pred_check_branch
      %178 = sbr.rel (%p176) target = $region13
    $region12: #{tpu_custom_call.1} parent=1 // pred_region
      %v179 = vcvt.f32.s32.to.zero.pseudo %v173
      %180 = vst.msk [vmem:[#allocation4] sm:$0x1] %vm174, %v179
    $region13: #{tpu_custom_call.1} parent=1 // pred_fallthru
      _
    // Predicated region
    $region14: #{tpu_custom_call.1} parent=1 // pred_check
      _
    $region15: #{tpu_custom_call.1} parent=1 // pred_check_branch
      %182 = sbr.rel (0) target = $region17
    $region16: #{tpu_custom_call.1} parent=1 // pred_region
      _
    $region17: #{tpu_custom_call.1} parent=1 // pred_fallthru
      _
    // Predicated region
    $region18: #{tpu_custom_call.1} parent=1 // pred_check
      _
    $region19: #{tpu_custom_call.1} parent=1 // pred_check_branch
      %184 = sbr.rel (0) target = $region21
    $region20: #{tpu_custom_call.1} parent=1 // pred_region
      _
    $region21: #{tpu_custom_call.1} parent=1 // pred_fallthru
      _
    // Predicated region
    $region22: #{tpu_custom_call.1} parent=1 // pred_check
      _
    $region23: #{tpu_custom_call.1} parent=1 // pred_check_branch
      %186 = sbr.rel (0) target = $region25
    $region24: #{tpu_custom_call.1} parent=1 // pred_region
      %s188 = ssub.s32 16, 16
      %189 = vsyncadd [#allocation5], %s188
      %s191 = sshll.u32 [#allocation4], 4
      %s192 = int_to_ptr.vmem [resolvable:$true] %s191
      %194 = dma.vmem_to_hbm [thread:$0]  %s192, 16, %s3, [#allocation5]
    $region25: #{tpu_custom_call.1} parent=1 // pred_fallthru
      _
    // Predicated region
    $region26: #{tpu_custom_call.1} parent=1 // pred_check
      _
    $region27: #{tpu_custom_call.1} parent=1 // pred_check_branch
      %196 = sbr.rel (0) target = $region29
    $region28: #{tpu_custom_call.1} parent=1 // pred_region
      _
    $region29: #{tpu_custom_call.1} parent=1 // pred_fallthru
      _
    // Predicated region
    $region30: #{tpu_custom_call.1} parent=1 // pred_check
      _
    $region31: #{tpu_custom_call.1} parent=1 // pred_check_branch
      %198 = sbr.rel (0) target = $region33
    $region32: #{tpu_custom_call.1} parent=1 // pred_region
      _
    $region33: #{tpu_custom_call.1} parent=1 // pred_fallthru
      _
    // Predicated region
    $region34: #{tpu_custom_call.1} parent=1 // pred_check
      _
    $region35: #{tpu_custom_call.1} parent=1 // pred_check_branch
      %200 = sbr.rel (0) target = $region37
    $region36: #{tpu_custom_call.1} parent=1 // pred_region
      %201 = dma.done [#allocation5], 16
    $region37: #{tpu_custom_call.1} parent=1 // pred_fallthru
      _
    %202 = vsyncpa [#allocation5], 1

</llo_original>
